<compile_context>
chip_gen: v6e
topology: v6e:2x2x1
jax: 0.10.0
libtpu: 0.0.40
codegen_flags: <defaults>
</compile_context>

<pallas_src>
import numpy as np
import jax
import jax.numpy as jnp
from jax import lax
from jax.experimental import pallas as pl
from jax.experimental.pallas import tpu as pltpu

# ----------------------------------------------------------------------------
# db3 filters (pywt convention, as used by pytorch_wavelets DWT1D/IDWT1D)
# ----------------------------------------------------------------------------
_DB3_DEC_LO = np.array([0.035226291882100656, -0.08544127388224149,
                        -0.13501102001039084, 0.4598775021193313,
                        0.8068915093133388, 0.3326705529509569], dtype=np.float64)
_DB3_DEC_HI = np.array([-0.3326705529509569, 0.8068915093133388,
                        -0.4598775021193313, -0.13501102001039084,
                        0.08544127388224149, 0.035226291882100656], dtype=np.float64)
_DB3_REC_LO = _DB3_DEC_LO[::-1].copy()
_DB3_REC_HI = _DB3_DEC_HI[::-1].copy()


def dwt_analysis_matrix(dec, n_in):
    """A of shape (coeff_len, n_in) so that coeffs = A @ x.
    Matches pytorch_wavelets DWT1DForward(J=1, mode='zero')."""
    taps = len(dec)                                   # 6 for db3
    outsize = (n_in + taps - 1) // 2                  # pywt.dwt_coeff_len, zero mode
    p = 2 * (outsize - 1) - n_in + taps               # total padding
    pad = p // 2
    h_rev = dec[::-1]                                 # prep_filt_afb1d reverses
    a = np.zeros((outsize, n_in), dtype=np.float32)
    for j in range(outsize):
        for k in range(taps):
            t = 2 * j + k - pad
            if 0 <= t < n_in:
                a[j, t] += h_rev[k]
    return a


def idwt_synthesis_matrix(rec, coeff_len, out_len):
    """S of shape (out_len, coeff_len) so that x = S @ coeffs (per sub-band).
    Matches pytorch_wavelets DWT1DInverse(mode='zero') conv_transpose path."""
    taps = len(rec)
    s = np.zeros((out_len, coeff_len), dtype=np.float32)
    for j in range(coeff_len):
        for k in range(taps):
            t = 2 * j + k - (taps - 2)                # stride 2, padding L-2
            if 0 <= t < out_len:
                s[t, j] += rec[k]
    return s


def _ceil_to(v, m):
    return (v + m - 1) // m * m


# ----------------------------------------------------------------------------
# Pallas kernel: one column tile of (time, B*n)
# ----------------------------------------------------------------------------
def _wft_kernel(x_ref, y_ref, m_ref, b_ref, out_ref):
    x = x_ref[...]                      # (seq_len, C)  f32
    y = y_ref[...]                      # (y_len, C)    f32
    lx = x.shape[0]
    ly = y.shape[0]

    # --- instance-normalize x along time (torch.var -> unbiased, eps=1e-5) ---
    xm = jnp.mean(x, axis=0, keepdims=True)
    xc = x - xm
    xv = jnp.sum(xc * xc, axis=0, keepdims=True) * (1.0 / (lx - 1))
    xn = xc * lax.rsqrt(xv + 1e-5)                    # rsqrt -> EUP slot

    # --- y statistics: the module re-uses y's mean/std to de-normalize pred ---
    ym = jnp.mean(y, axis=0, keepdims=True)
    yc = y - ym
    yv = jnp.sum(yc * yc, axis=0, keepdims=True) * (1.0 / (ly - 1))
    ystd = jnp.sqrt(yv + 1e-5)
    # TODO(synk): torch forward also runs self.cwt on normalized y (y_yl, y_yh1)
    # but never uses the result; that dead computation is skipped here.

    # --- folded DWT -> linear heads -> IDWT: one bf16 matmul + bias ---
    pred = jnp.dot(m_ref[...], xn.astype(jnp.bfloat16),
                   preferred_element_type=jnp.float32) + b_ref[...]

    # --- de-normalize with y's statistics (exactly as the torch code does) ---
    out_ref[...] = pred * ystd + ym


def wft_forward(x, x_stamp, y, y_stamp, kparams, *, pred_len):
    """x: (B, seq_len, n), y: (B, y_len, n).  Stamps are unused by the torch
    forward and are ignored.  Returns (B, pred_len, n) float32."""
    del x_stamp, y_stamp
    b, lx, n = x.shape
    _, ly, _ = y.shape

    m = kparams["M"]            # (pred_pad, seq_len) bf16, rows >= pred_len zero
    bias = kparams["bias"]      # (pred_pad, 1) f32
    pred_pad = m.shape[0]

    # Fold batch into the lane/column axis: (B, L, n) -> (L, B*n).
    cols = b * n
    lane = 128
    target = 512                # <= a few MiB/tile even at seq_len ~ 720 (v7x-safe)
    if cols <= target:
        cols_pad = _ceil_to(cols, lane)
        col_tile = cols_pad
    else:
        col_tile = target
        cols_pad = _ceil_to(cols, col_tile)

    x2 = jnp.transpose(x, (1, 0, 2)).reshape(lx, cols)
    y2 = jnp.transpose(y, (1, 0, 2)).reshape(ly, cols)
    if cols_pad != cols:
        x2 = jnp.pad(x2, ((0, 0), (0, cols_pad - cols)))
        y2 = jnp.pad(y2, ((0, 0), (0, cols_pad - cols)))

    grid = (cols_pad // col_tile,)

    out2 = pl.pallas_call(
        _wft_kernel,
        out_shape=jax.ShapeDtypeStruct((pred_pad, cols_pad), jnp.float32),
        grid_spec=pltpu.PrefetchScalarGridSpec(
            num_scalar_prefetch=0,
            grid=grid,
            in_specs=[
                pl.BlockSpec((lx, col_tile), lambda j: (0, j)),        # x tile
                pl.BlockSpec((ly, col_tile), lambda j: (0, j)),        # y tile
                pl.BlockSpec((pred_pad, lx), lambda j: (0, 0)),        # folded M
                pl.BlockSpec((pred_pad, 1), lambda j: (0, 0)),         # folded bias
            ],
            out_specs=pl.BlockSpec((pred_pad, col_tile), lambda j: (0, j)),
        ),
        # column tiles are fully independent -> shard across TCs on v7x
        compiler_params=pltpu.CompilerParams(dimension_semantics=("parallel",)),
    )(x2, y2, m, bias)

    out = out2[:pred_len, :cols].reshape(pred_len, b, n)
    return jnp.transpose(out, (1, 0, 2))


# ----------------------------------------------------------------------------
# Deterministic parameter construction (synthetic weights, no checkpoint)
# ----------------------------------------------------------------------------
def init_params(key, seq_len, pred_len):
    lc_in = seq_len // 2 + 2
    lc_out = pred_len // 2 + 2
    k1, k2, k3, k4 = jax.random.split(key, 4)
    bound = 1.0 / np.sqrt(lc_in)
    w_yh = jax.random.uniform(k1, (lc_out, lc_in), jnp.float32, -bound, bound)
    b_yh = jax.random.uniform(k2, (lc_out, 1), jnp.float32, -bound, bound)
    w_yl = jax.random.uniform(k3, (lc_out, lc_in), jnp.float32, -bound, bound)
    b_yl = jax.random.uniform(k4, (lc_out, 1), jnp.float32, -bound, bound)

    A_lo = jnp.asarray(dwt_analysis_matrix(_DB3_DEC_LO, seq_len))      # (lc_in, L)
    A_hi = jnp.asarray(dwt_analysis_matrix(_DB3_DEC_HI, seq_len))
    S_lo = jnp.asarray(idwt_synthesis_matrix(_DB3_REC_LO, lc_out, pred_len))  # (P, lc_out)
    S_hi = jnp.asarray(idwt_synthesis_matrix(_DB3_REC_HI, lc_out, pred_len))

    raw = dict(A_lo=A_lo, A_hi=A_hi, S_lo=S_lo, S_hi=S_hi,
               w_yl=w_yl, b_yl=b_yl, w_yh=w_yh, b_yh=b_yh)

    # Fold the entire linear chain:  pred = M @ xn + bvec  (per column).
    M = S_lo @ w_yl @ A_lo + S_hi @ w_yh @ A_hi        # (pred_len, seq_len)
    bvec = S_lo @ b_yl + S_hi @ b_yh                   # (pred_len, 1)

    # Zero-pad pred_len rows up to a multiple of 8 so the output tile is
    # (8,128)-aligned; padded rows are sliced off in the wrapper.
    pred_pad = _ceil_to(pred_len, 8)
    M_pad = jnp.zeros((pred_pad, seq_len), jnp.float32).at[:pred_len].set(M)
    b_pad = jnp.zeros((pred_pad, 1), jnp.float32).at[:pred_len].set(bvec)

    kparams = dict(M=M_pad.astype(jnp.bfloat16),       # bf16 MXU operand
                   bias=b_pad)                         # bias stays f32
    return kparams, raw


# Plain-JAX f32 reference mirroring the original torch math (unfolded, NLC)
# used only as a runtime sanity check.
def wft_reference(x, y, raw):
    xm = x.mean(axis=1, keepdims=True)
    xc = x - xm
    xv = jnp.sum(xc * xc, axis=1, keepdims=True) / (x.shape[1] - 1)
    xn = xc / jnp.sqrt(xv + 1e-5)
    ym = y.mean(axis=1, keepdims=True)
    yc = y - ym
    yv = jnp.sum(yc * yc, axis=1, keepdims=True) / (y.shape[1] - 1)
    ystd = jnp.sqrt(yv + 1e-5)
    xt = jnp.transpose(xn, (0, 2, 1))                          # (B, n, seq_len)
    yl = xt @ raw["A_lo"].T
    yh = xt @ raw["A_hi"].T
    yl_p = yl @ raw["w_yl"].T + raw["b_yl"][:, 0]
    yh_p = yh @ raw["w_yh"].T + raw["b_yh"][:, 0]
    pred = yl_p @ raw["S_lo"].T + yh_p @ raw["S_hi"].T         # (B, n, pred_len)
    pred = jnp.transpose(pred, (0, 2, 1))
    return pred * ystd + ym


if __name__ == "__main__":
    class Args:
        seq_len = 16
        pred_len = 8
        label_len = 4

    B, N = 2, 4
    key = jax.random.PRNGKey(0)
    kx, ky, kxs, kys, kp = jax.random.split(key, 5)
    x = jax.random.normal(kx, (B, Args.seq_len, N), jnp.float32)
    y = jax.random.normal(ky, (B, Args.label_len + Args.pred_len, N), jnp.float32)
    x_stamp = jax.random.normal(kxs, (B, Args.seq_len, 3), jnp.float32)
    y_stamp = jax.random.normal(kys, (B, Args.label_len + Args.pred_len, 3), jnp.float32)

    kparams, raw = init_params(kp, Args.seq_len, Args.pred_len)

    out = wft_forward(x, x_stamp, y, y_stamp, kparams, pred_len=Args.pred_len)
    out = jax.block_until_ready(out)

    ref = wft_reference(x, y, raw)
    assert out.shape == (B, Args.pred_len, N), out.shape
    # Tolerance accounts for the bf16 MXU operands (M and xn); the reference
    # runs the unfolded chain fully in f32.
    np.testing.assert_allclose(np.asarray(out), np.asarray(ref), rtol=5e-2, atol=5e-2)
    print("KERNEL_OK")
</pallas_src>

<mosaic_0001>
module attributes {stable_mosaic.version = 11 : i64} {
  func.func @_wft_kernel(%arg0: i32, %arg1: memref<16x128xf32, #tpu.memory_space<vmem>>, %arg2: memref<12x128xf32, #tpu.memory_space<vmem>>, %arg3: memref<8x16xbf16, #tpu.memory_space<vmem>>, %arg4: memref<8x1xf32, #tpu.memory_space<vmem>>, %arg5: memref<8x128xf32, #tpu.memory_space<vmem>>) attributes {dimension_semantics = [#tpu.dimension_semantics<parallel>], iteration_bounds = array<i64: 1>, scalar_prefetch = 0 : i64, scratch_operands = 0 : i64, tpu.core_type = #tpu.core_type<tc>, window_params = [{transform_indices = @transform_0, window_bounds = array<i64: 16, 128>}, {transform_indices = @transform_1, window_bounds = array<i64: 12, 128>}, {pipeline_mode = #tpu.pipeline_mode<synchronous>, transform_indices = @transform_2, window_bounds = array<i64: 8, 16>}, {pipeline_mode = #tpu.pipeline_mode<synchronous>, transform_indices = @transform_3, window_bounds = array<i64: 8, 1>}, {transform_indices = @transform_4, window_bounds = array<i64: 8, 128>}]} {
    %c0 = arith.constant 0 : index
    %c0_0 = arith.constant 0 : index
    %0 = vector.load %arg1[%c0, %c0_0] : memref<16x128xf32, #tpu.memory_space<vmem>>, vector<16x128xf32>
    %c0_1 = arith.constant 0 : index
    %c0_2 = arith.constant 0 : index
    %1 = vector.load %arg2[%c0_1, %c0_2] : memref<12x128xf32, #tpu.memory_space<vmem>>, vector<12x128xf32>
    %cst = arith.constant dense<0.000000e+00> : vector<128xf32>
    %2 = vector.multi_reduction <add>, %0, %cst [0] : vector<16x128xf32> to vector<128xf32>
    %3 = vector.shape_cast %2 : vector<128xf32> to vector<1x128xf32>
    %cst_3 = arith.constant 1.600000e+01 : f32
    %4 = vector.broadcast %cst_3 : f32 to vector<1x128xf32>
    %5 = arith.divf %3, %4 : vector<1x128xf32>
    %6 = vector.broadcast %5 : vector<1x128xf32> to vector<16x128xf32>
    %7 = arith.subf %0, %6 : vector<16x128xf32>
    %8 = arith.mulf %7, %7 : vector<16x128xf32>
    %cst_4 = arith.constant dense<0.000000e+00> : vector<128xf32>
    %9 = vector.multi_reduction <add>, %8, %cst_4 [0] : vector<16x128xf32> to vector<128xf32>
    %10 = vector.shape_cast %9 : vector<128xf32> to vector<1x128xf32>
    %cst_5 = arith.constant 0.0666666701 : f32
    %11 = vector.broadcast %cst_5 : f32 to vector<1x128xf32>
    %12 = arith.mulf %10, %11 : vector<1x128xf32>
    %cst_6 = arith.constant 9.99999974E-6 : f32
    %13 = vector.broadcast %cst_6 : f32 to vector<1x128xf32>
    %14 = arith.addf %12, %13 : vector<1x128xf32>
    %15 = math.rsqrt %14 : vector<1x128xf32>
    %16 = vector.broadcast %15 : vector<1x128xf32> to vector<16x128xf32>
    %17 = arith.mulf %7, %16 : vector<16x128xf32>
    %cst_7 = arith.constant dense<0.000000e+00> : vector<128xf32>
    %18 = vector.multi_reduction <add>, %1, %cst_7 [0] : vector<12x128xf32> to vector<128xf32>
    %19 = vector.shape_cast %18 : vector<128xf32> to vector<1x128xf32>
    %cst_8 = arith.constant 1.200000e+01 : f32
    %20 = vector.broadcast %cst_8 : f32 to vector<1x128xf32>
    %21 = arith.divf %19, %20 : vector<1x128xf32>
    %22 = vector.broadcast %21 : vector<1x128xf32> to vector<12x128xf32>
    %23 = arith.subf %1, %22 : vector<12x128xf32>
    %24 = arith.mulf %23, %23 : vector<12x128xf32>
    %cst_9 = arith.constant dense<0.000000e+00> : vector<128xf32>
    %25 = vector.multi_reduction <add>, %24, %cst_9 [0] : vector<12x128xf32> to vector<128xf32>
    %26 = vector.shape_cast %25 : vector<128xf32> to vector<1x128xf32>
    %cst_10 = arith.constant 0.0909090936 : f32
    %27 = vector.broadcast %cst_10 : f32 to vector<1x128xf32>
    %28 = arith.mulf %26, %27 : vector<1x128xf32>
    %cst_11 = arith.constant 9.99999974E-6 : f32
    %29 = vector.broadcast %cst_11 : f32 to vector<1x128xf32>
    %30 = arith.addf %28, %29 : vector<1x128xf32>
    %31 = math.sqrt %30 : vector<1x128xf32>
    %c0_12 = arith.constant 0 : index
    %c0_13 = arith.constant 0 : index
    %32 = vector.load %arg3[%c0_12, %c0_13] : memref<8x16xbf16, #tpu.memory_space<vmem>>, vector<8x16xbf16>
    %33 = arith.truncf %17 : vector<16x128xf32> to vector<16x128xbf16>
    %cst_14 = arith.constant dense<0.000000e+00> : vector<8x128xf32>
    %34 = tpu.matmul %32, %33, %cst_14 {dimension_numbers = #tpu.dot_dimension_numbers<[1], [0], [0], [1], [0, 0, 1, 1], [], []>} : vector<8x16xbf16>, vector<16x128xbf16>, vector<8x128xf32> -> vector<8x128xf32>
    %c0_15 = arith.constant 0 : index
    %c0_16 = arith.constant 0 : index
    %35 = vector.load %arg4[%c0_15, %c0_16] : memref<8x1xf32, #tpu.memory_space<vmem>>, vector<8x1xf32>
    %36 = vector.broadcast %35 : vector<8x1xf32> to vector<8x128xf32>
    %37 = arith.addf %34, %36 : vector<8x128xf32>
    %38 = vector.broadcast %31 : vector<1x128xf32> to vector<8x128xf32>
    %39 = arith.mulf %37, %38 : vector<8x128xf32>
    %40 = vector.broadcast %21 : vector<1x128xf32> to vector<8x128xf32>
    %41 = arith.addf %39, %40 : vector<8x128xf32>
    %c0_17 = arith.constant 0 : index
    %c0_18 = arith.constant 0 : index
    %42 = vector.load %arg5[%c0_17, %c0_18] : memref<8x128xf32, #tpu.memory_space<vmem>>, vector<8x128xf32>
    tpu.vector_store %arg5[%c0_17, %c0_18], %41 {strides = array<i32>} : memref<8x128xf32, #tpu.memory_space<vmem>>, vector<8x128xf32>,
    return
  }
  func.func @transform_0(%arg0: i32) -> (i32, i32) {
    %c0_i32 = arith.constant 0 : i32
    %c0_i32_0 = arith.constant 0 : i32
    return %c0_i32, %arg0 : i32, i32
  }
  func.func @transform_1(%arg0: i32) -> (i32, i32) {
    %c0_i32 = arith.constant 0 : i32
    %c0_i32_0 = arith.constant 0 : i32
    return %c0_i32, %arg0 : i32, i32
  }
  func.func @transform_2(%arg0: i32) -> (i32, i32) {
    %c0_i32 = arith.constant 0 : i32
    %c0_i32_0 = arith.constant 0 : i32
    %c0_i32_1 = arith.constant 0 : i32
    return %c0_i32, %c0_i32_0 : i32, i32
  }
  func.func @transform_3(%arg0: i32) -> (i32, i32) {
    %c0_i32 = arith.constant 0 : i32
    %c0_i32_0 = arith.constant 0 : i32
    %c0_i32_1 = arith.constant 0 : i32
    return %c0_i32, %c0_i32_0 : i32, i32
  }
  func.func @transform_4(%arg0: i32) -> (i32, i32) {
    %c0_i32 = arith.constant 0 : i32
    %c0_i32_0 = arith.constant 0 : i32
    return %c0_i32, %arg0 : i32, i32
  }
}

</mosaic_0001>

<llo_original>
// kernel: tpu_custom_call.1
$region0: #{tpu_custom_call.1}
  #allocation0 [shape = 'u32[]', space=smem, size = 0x4, offset = 0x4, fixed_abs, tag = 'smem constant byte address 0x4 - core index']
  #allocation1 [shape = 'u32[144,128]{1,0:T(1,128)}', space=vmem, size = 0x12000, scoped, tag = 'internal scratch']
  %s0 = inlined_call_operand.hbm [shape: f32[16,128], index: 0, kind: input, shape index: {}]
  %s1 = inlined_call_operand.hbm [shape: f32[12,128], index: 1, kind: input, shape index: {}]
  %s2 = inlined_call_operand.vmem [shape: bf16[8,16], index: 2, kind: input, shape index: {}]
  %s3 = inlined_call_operand.vmem [shape: f32[8,1], index: 3, kind: input, shape index: {}]
  %s4 = inlined_call_operand.hbm [shape: f32[8,128], index: 4, kind: output, shape index: {}]
  %s5 = sld [smem:[#allocation0]]
  $region34: #{tpu_custom_call.1} parent=0
    _
  %s7 = ssub.s32 1, %s5
  %s8 = scalar_select 0, %s7, %s5
  $region1: #{tpu_custom_call.1} parent=0
    #allocation2 [shape = 'u8[8192]{0}', space=vmem, size = 0x2000, scoped, tag = 'input window, operand 0, single buffered']
    #allocation3 [shape = 's32[1]{0}', space=sflag, size = 0x4, scoped, tag = 'scoped memory for tpu_custom_call.1']
    #allocation4 [shape = 's32[1]{0}', space=sflag, size = 0x4, scoped, tag = 'scoped memory for tpu_custom_call.1']
    #allocation5 [shape = 'u8[8192]{0}', space=vmem, size = 0x2000, scoped, tag = 'input window, operand 1, single buffered']
    #allocation6 [shape = 's32[1]{0}', space=sflag, size = 0x4, scoped, tag = 'scoped memory for tpu_custom_call.1']
    #allocation7 [shape = 'u8[4096]{0}', space=vmem, size = 0x1000, scoped, tag = 'output window, operand 0, single buffered']
    %9 = vsyncpa [#allocation3], 0
    %10 = vsyncpa [#allocation6], 0
    %11 = vsyncpa [#allocation4], 0
    // Predicated region
    $region2: #{tpu_custom_call.1} parent=1 // pred_check
      _
    $region3: #{tpu_custom_call.1} parent=1 // pred_check_branch
      %13 = sbr.rel (0) target = $region5
    $region4: #{tpu_custom_call.1} parent=1 // pred_region
      %s15 = ssub.s32 256, 256
      %16 = vsyncadd [#allocation3], %s15
      %s17 = sshll.u32 [#allocation2], 4
      %s18 = int_to_ptr.vmem [resolvable:$true] %s17
      %23 = dma.hbm_to_vmem [thread:$0]  %s0, 256, %s18, [#allocation3], 128, 128, 8
    $region5: #{tpu_custom_call.1} parent=1 // pred_fallthru
      _
    // Predicated region
    $region6: #{tpu_custom_call.1} parent=1 // pred_check
      _
    $region7: #{tpu_custom_call.1} parent=1 // pred_check_branch
      %25 = sbr.rel (0) target = $region9
    $region8: #{tpu_custom_call.1} parent=1 // pred_region
      %s27 = ssub.s32 256, 256
      %28 = vsyncadd [#allocation6], %s27
      %s29 = sshll.u32 [#allocation5], 4
      %s30 = int_to_ptr.vmem [resolvable:$true] %s29
      %35 = dma.hbm_to_vmem [thread:$0]  %s1, 256, %s30, [#allocation6], 128, 128, 8
    $region9: #{tpu_custom_call.1} parent=1 // pred_fallthru
      _
    // Predicated region
    $region10: #{tpu_custom_call.1} parent=1 // pred_check
      _
    $region11: #{tpu_custom_call.1} parent=1 // pred_check_branch
      %37 = sbr.rel (0) target = $region13
    $region12: #{tpu_custom_call.1} parent=1 // pred_region
      _
    $region13: #{tpu_custom_call.1} parent=1 // pred_fallthru
      _
    // Predicated region
    $region14: #{tpu_custom_call.1} parent=1 // pred_check
      _
    $region15: #{tpu_custom_call.1} parent=1 // pred_check_branch
      %39 = sbr.rel (0) target = $region17
    $region16: #{tpu_custom_call.1} parent=1 // pred_region
      _
    $region17: #{tpu_custom_call.1} parent=1 // pred_fallthru
      _
    // Predicated region
    $region18: #{tpu_custom_call.1} parent=1 // pred_check
      _
    $region19: #{tpu_custom_call.1} parent=1 // pred_check_branch
      %41 = sbr.rel (0) target = $region21
    $region20: #{tpu_custom_call.1} parent=1 // pred_region
      %42 = dma.done [#allocation3], 256
    $region21: #{tpu_custom_call.1} parent=1 // pred_fallthru
      _
    // Predicated region
    $region22: #{tpu_custom_call.1} parent=1 // pred_check
      _
    $region23: #{tpu_custom_call.1} parent=1 // pred_check_branch
      %44 = sbr.rel (0) target = $region25
    $region24: #{tpu_custom_call.1} parent=1 // pred_region
      %45 = dma.done [#allocation6], 256
    $region25: #{tpu_custom_call.1} parent=1 // pred_fallthru
      _
    %v47 = vld [vmem:[#allocation2] sm:$0xff]
    %v48 = vld [vmem:[#allocation2 + $0x8] sm:$0xff]
    %v49 = vld [vmem:[#allocation5] sm:$0xff]
    %v50 = vld [vmem:[#allocation5 + $0x8] sm:$0xf]
    %v51 = vadd.f32 %v47, %v48
    %v52 = vrot.slane %v51, 4
    %v53 = vadd.f32 %v51, %v52
    %v54 = vrot.slane %v53, 2
    %v55 = vadd.f32 %v53, %v54
    %v56 = vrot.slane %v55, 1
    %v57 = vadd.f32 %v55, %v56
    %v58 = vrcp.pop 16.0
    %v59 = vmul.f32 %v57, %v58
    %v60 = vsub.f32 %v47, %v59
    %v61 = vsub.f32 %v48, %v59
    %v62 = vmul.f32 %v60, %v60
    %v63 = vmul.f32 %v61, %v61
    %v64 = vadd.f32 %v62, %v63
    %v65 = vrot.slane %v64, 4
    %v66 = vadd.f32 %v64, %v65
    %v67 = vrot.slane %v66, 2
    %v68 = vadd.f32 %v66, %v67
    %v69 = vrot.slane %v68, 1
    %v70 = vadd.f32 %v68, %v69
    %v71 = vmul.f32 %v70, 0.06666667
    %v72 = vadd.f32 %v71, 1e-05
    %v73 = vrsqrt.pop %v72
    %v74 = vmul.f32 %v60, %v73
    %v75 = vmul.f32 %v61, %v73
    %vm76 = vcmask 1043456
    %v77 = vsel %vm76, %v50, 0.0
    %v78 = vadd.f32 %v49, %v77
    %v79 = vrot.slane %v78, 4
    %v80 = vadd.f32 %v78, %v79
    %v81 = vrot.slane %v80, 2
    %v82 = vadd.f32 %v80, %v81
    %v83 = vrot.slane %v82, 1
    %v84 = vadd.f32 %v82, %v83
    %v85 = vrcp.pop 12.0
    %v86 = vmul.f32 %v84, %v85
    %v87 = vsub.f32 %v49, %v86
    %v88 = vsub.f32 %v50, %v86
    %v89 = vmul.f32 %v87, %v87
    %v90 = vmul.f32 %v88, %v88
    %v91 = vsel %vm76, %v90, 0.0
    %v92 = vadd.f32 %v89, %v91
    %v93 = vrot.slane %v92, 4
    %v94 = vadd.f32 %v92, %v93
    %v95 = vrot.slane %v94, 2
    %v96 = vadd.f32 %v94, %v95
    %v97 = vrot.slane %v96, 1
    %v98 = vadd.f32 %v96, %v97
    %v99 = vmul.f32 %v98, 0.09090909
    %v100 = vadd.f32 %v99, 1e-05
    %v101 = vrsqrt.pop %v100
    %v102 = vmul.f32 %v100, %v101
    %vm103 = vcmp.eq.f32.partialorder %v100, inf
    %v104 = vsel %vm103, %v100, %v102
    %vm105 = vcmp.eq.f32.partialorder %v100, 0.0
    %v106 = vand.u32 %v100, 2147483648
    %v107 = vsel %vm105, %v106, %v104
    %v108 = vld [vmem:[%s2] sm:$0xf]
    %v109 = vpack.c.bf16 %v75, %v74
    %v110 = vld [vmem:[%s3] sm:$0xff]
    %112 = vset.pattern.permute.xlu0 0
    %113 = vperm.xlu0 %112, %v110
    %v114 = vpop.permute.xlu0 %113
    %vm116 = vcmask 130048
    %v118 = vsel %vm116, %v108, 0
    %120 = vmatprep.subr.bf16.mxu0 0
    %121 = vmatpush1.bf16.msra.mxu0 0
    %122 = vmatprep.subr.bf16.mxu0 0
    %123 = vmatpush1.bf16.msra.mxu0 0
    %124 = vmatprep.subr.bf16.mxu0 0
    %125 = vmatpush1.bf16.msra.mxu0 0
    %126 = vmatprep.subr.bf16.mxu0 0
    %127 = vmatpush1.bf16.msra.mxu0 0
    %128 = vmatprep.subr.bf16.mxu0 0
    %129 = vmatpush1.bf16.msra.mxu0 0
    %130 = vmatprep.subr.bf16.mxu0 0
    %131 = vmatpush1.bf16.msra.mxu0 0
    %132 = vmatprep.subr.bf16.mxu0 0
    %133 = vmatpush1.bf16.msra.mxu0 0
    %134 = vmatprep.subr.bf16.mxu0 0
    %135 = vmatpush1.bf16.msra.mxu0 %v109
    %136 = vmatprep.subr.bf16.mxu0 0
    %137 = vmatpush2.bf16.msra.mxu0 0
    %138 = vmatprep.subr.bf16.mxu0 0
    %139 = vmatpush2.bf16.msra.mxu0 0
    %140 = vmatprep.subr.bf16.mxu0 0
    %141 = vmatpush2.bf16.msra.mxu0 0
    %142 = vmatprep.subr.bf16.mxu0 0
    %143 = vmatpush2.bf16.msra.mxu0 0
    %144 = vmatprep.subr.bf16.mxu0 0
    %145 = vmatpush2.bf16.msra.mxu0 0
    %146 = vmatprep.subr.bf16.mxu0 0
    %147 = vmatpush2.bf16.msra.mxu0 0
    %148 = vmatprep.subr.bf16.mxu0 0
    %149 = vmatpush2.bf16.msra.mxu0 0
    %150 = vmatprep.subr.bf16.mxu0 0
    %151 = vmatpush2.bf16.msra.mxu0 0
    %152 = vmatprep.mubr.bf16.mxu0 0
    %153 = vmatmul.mubr.bf16.gmra.mxu0 %v118
    %v154 = vpop.f32.mrf.mxu0
    %v155 = vadd.f32 %v114, %v154
    %v156 = vpop.f32.mrf.mxu0
    %v157 = vpop.f32.mrf.mxu0
    %v158 = vpop.f32.mrf.mxu0
    %159 = vdwg.mxu0
    %v160 = vmul.f32 %v155, %v107
    %v161 = vadd.f32 %v160, %v86
    %162 = vst [vmem:[#allocation7] sm:$0xff] %v161
    // Predicated region
    $region26: #{tpu_custom_call.1} parent=1 // pred_check
      _
    $region27: #{tpu_custom_call.1} parent=1 // pred_check_branch
      %164 = sbr.rel (0) target = $region29
    $region28: #{tpu_custom_call.1} parent=1 // pred_region
      %s166 = ssub.s32 128, 128
      %167 = vsyncadd [#allocation4], %s166
      %s169 = sshll.u32 [#allocation7], 4
      %s170 = int_to_ptr.vmem [resolvable:$true] %s169
      %172 = dma.vmem_to_hbm [thread:$0]  %s170, 128, %s4, [#allocation4]
    $region29: #{tpu_custom_call.1} parent=1 // pred_fallthru
      _
    // Predicated region
    $region30: #{tpu_custom_call.1} parent=1 // pred_check
      _
    $region31: #{tpu_custom_call.1} parent=1 // pred_check_branch
      %174 = sbr.rel (0) target = $region33
    $region32: #{tpu_custom_call.1} parent=1 // pred_region
      %175 = dma.done [#allocation4], 128
    $region33: #{tpu_custom_call.1} parent=1 // pred_fallthru
      _
    %176 = vsyncpa [#allocation3], 1
    %177 = vsyncpa [#allocation6], 1
    %178 = vsyncpa [#allocation4], 1

</llo_original>
